<compile_context>
chip_gen: v5e
topology: v5e:2x2
jax: 0.10.0
libtpu: 0.0.40
codegen_flags: <defaults>
</compile_context>

<pallas_src>
import functools

import jax
import jax.numpy as jnp
from jax.experimental import pallas as pl
from jax.experimental.pallas import tpu as pltpu


def hypernet_kernel(ray_ref, aux_ref, wh_ref, whead_ref, out_ref, *, r_dim):
    """Whole HyperNet forward in one kernel invocation (all operands fit in VMEM)."""
    r0 = ray_ref[0]                            # scalar reads from SMEM
    r1 = ray_ref[1]
    aux = aux_ref[...]                         # (6, Gpad) f32

    # Layer 1 (M=1, K=2) on the VPU: scalar*row + scalar*row + bias (no MXU push/drain).
    h = r0 * aux[0:1, :r_dim] + r1 * aux[1:2, :r_dim] + aux[2:3, :r_dim]   # (1, R)
    h = jnp.maximum(h, 0.0)

    # Layers 2 and 3 on the MXU (hidden weights come from one stacked slab).
    h = jnp.dot(h, wh_ref[0], preferred_element_type=jnp.float32) + aux[3:4, :r_dim]
    h = jnp.maximum(h, 0.0)
    feat = jnp.dot(h, wh_ref[1], preferred_element_type=jnp.float32) + aux[4:5, :r_dim]

    # Fused gate heads (dropout == identity in eval mode): one matmul, lane-dense store.
    out_ref[...] = (jnp.dot(feat, whead_ref[...], preferred_element_type=jnp.float32)
                    + aux[5:6, :])


def _pad_cols(x, width):
    return jnp.pad(x, ((0, 0), (0, width - x.shape[1])))


def pack_params(params):
    """Pack the 10 Linear tensors into 3 tile-friendly slabs (done once, outside jit)."""
    (w1, b1, w2, b2, w3, b3, wg, bg, wb, bb) = params
    gw_dim = wg.shape[1]
    gb_dim = wb.shape[1]
    g_pad = ((gw_dim + gb_dim + 127) // 128) * 128

    aux = jnp.concatenate([
        _pad_cols(w1, g_pad),                                   # rows 0-1: w1 (in, out)
        _pad_cols(b1, g_pad),                                   # row 2
        _pad_cols(b2, g_pad),                                   # row 3
        _pad_cols(b3, g_pad),                                   # row 4
        _pad_cols(jnp.concatenate([bg, bb], axis=1), g_pad),    # row 5: fused head bias
    ], axis=0).astype(jnp.float32)                              # (6, g_pad)

    w_hidden = jnp.stack([w2, w3], axis=0).astype(jnp.float32)  # (2, R, R)
    w_head = _pad_cols(jnp.concatenate([wg, wb], axis=1),
                       g_pad).astype(jnp.float32)               # (R, g_pad), zero-padded

    return {"aux": aux, "w_hidden": w_hidden, "w_head": w_head}


def hypernet_forward(ray, packed, *, gw_dim, gb_dim):
    """ray: (2,) float32. Returns dict with 'gate_weights' (th*out,) and 'gate_bias' (out,)."""
    aux, w_hidden, w_head = packed["aux"], packed["w_hidden"], packed["w_head"]
    r_dim = w_hidden.shape[1]
    g_pad = w_head.shape[1]

    # Advisory cost hint for XLA's scheduler (tiny kernel).
    flops = 2 * (2 * r_dim + 2 * r_dim * r_dim + r_dim * g_pad)
    bytes_accessed = 4 * (2 + aux.size + w_hidden.size + w_head.size + g_pad)

    vmem = pl.BlockSpec(memory_space=pltpu.MemorySpace.VMEM)
    smem = pl.BlockSpec(memory_space=pltpu.MemorySpace.SMEM)

    fused = pl.pallas_call(
        functools.partial(hypernet_kernel, r_dim=r_dim),
        out_shape=jax.ShapeDtypeStruct((1, g_pad), jnp.float32),
        in_specs=[smem, vmem, vmem, vmem],
        out_specs=vmem,
        cost_estimate=pl.CostEstimate(flops=flops, transcendentals=0,
                                      bytes_accessed=bytes_accessed),
    )(ray.astype(jnp.float32), aux, w_hidden, w_head)

    return {
        "gate_weights": fused[0, :gw_dim],
        "gate_bias": fused[0, gw_dim:gw_dim + gb_dim],   # .flatten() in the PyTorch code
    }


def init_params(key, ray_hidden_dim=32, out_dim=8, target_hidden_dim=16):
    """Deterministic init mimicking PyTorch Linear default (uniform +/- 1/sqrt(fan_in)).
    Weights are stored as (in, out); biases as (1, out)."""
    def linear(k, fan_in, fan_out):
        kw, kb = jax.random.split(k)
        bound = 1.0 / jnp.sqrt(jnp.float32(fan_in))
        w = jax.random.uniform(kw, (fan_in, fan_out), jnp.float32, -bound, bound)
        b = jax.random.uniform(kb, (1, fan_out), jnp.float32, -bound, bound)
        return w, b

    keys = jax.random.split(key, 5)
    w1, b1 = linear(keys[0], 2, ray_hidden_dim)
    w2, b2 = linear(keys[1], ray_hidden_dim, ray_hidden_dim)
    w3, b3 = linear(keys[2], ray_hidden_dim, ray_hidden_dim)
    wg, bg = linear(keys[3], ray_hidden_dim, target_hidden_dim * out_dim)
    wb, bb = linear(keys[4], ray_hidden_dim, out_dim)
    return (w1, b1, w2, b2, w3, b3, wg, bg, wb, bb)


def reference_forward(ray, params):
    """Pure-JAX reference (eval-mode dropout)."""
    (w1, b1, w2, b2, w3, b3, wg, bg, wb, bb) = params
    x = ray.reshape(1, -1)
    h = jnp.maximum(x @ w1 + b1, 0.0)
    h = jnp.maximum(h @ w2 + b2, 0.0)
    feat = h @ w3 + b3
    return {
        "gate_weights": (feat @ wg + bg).reshape(-1),
        "gate_bias": (feat @ wb + bb).reshape(-1),
    }


if __name__ == "__main__":
    key = jax.random.PRNGKey(0)
    k_params, k_ray = jax.random.split(key)

    ray_hidden_dim, out_dim, target_hidden_dim = 32, 8, 16
    params = init_params(k_params, ray_hidden_dim, out_dim, target_hidden_dim)
    packed = pack_params(params)

    # "ray" is a 2-task preference vector on the simplex.
    r = jax.random.uniform(k_ray, (2,), jnp.float32, 0.1, 1.0)
    ray = r / jnp.sum(r)

    fwd = jax.jit(functools.partial(hypernet_forward,
                                    gw_dim=target_hidden_dim * out_dim,
                                    gb_dim=out_dim))
    out = fwd(ray, packed)
    jax.block_until_ready(out)

    ref = reference_forward(ray, params)
    assert out["gate_weights"].shape == (target_hidden_dim * out_dim,)
    assert out["gate_bias"].shape == (out_dim,)
    assert jnp.allclose(out["gate_weights"], ref["gate_weights"], atol=1e-5, rtol=1e-5)
    assert jnp.allclose(out["gate_bias"], ref["gate_bias"], atol=1e-5, rtol=1e-5)

    print("KERNEL_OK")
</pallas_src>

<mosaic_0001>
module attributes {stable_mosaic.version = 11 : i64} {
  func.func @hypernet_kernel(%arg0: memref<2xf32, #tpu.memory_space<smem>>, %arg1: memref<6x256xf32, #tpu.memory_space<vmem>>, %arg2: memref<2x32x32xf32, #tpu.memory_space<vmem>>, %arg3: memref<32x256xf32, #tpu.memory_space<vmem>>, %arg4: memref<1x256xf32, #tpu.memory_space<vmem>>) attributes {dimension_semantics = [], scalar_prefetch = 0 : i64, scratch_operands = 0 : i64, tpu.core_type = #tpu.core_type<tc>} {
    %c0 = arith.constant 0 : index
    %0 = memref.load %arg0[%c0] : memref<2xf32, #tpu.memory_space<smem>>
    %c1 = arith.constant 1 : index
    %1 = memref.load %arg0[%c1] : memref<2xf32, #tpu.memory_space<smem>>
    %c0_0 = arith.constant 0 : index
    %c0_1 = arith.constant 0 : index
    %2 = vector.load %arg1[%c0_0, %c0_1] : memref<6x256xf32, #tpu.memory_space<vmem>>, vector<6x256xf32>
    %3 = vector.extract_strided_slice %2 {offsets = [0, 0], sizes = [1, 32], strides = [1, 1]} : vector<6x256xf32> to vector<1x32xf32>
    %4 = vector.broadcast %0 : f32 to vector<1x32xf32>
    %5 = arith.mulf %4, %3 : vector<1x32xf32>
    %6 = vector.extract_strided_slice %2 {offsets = [1, 0], sizes = [1, 32], strides = [1, 1]} : vector<6x256xf32> to vector<1x32xf32>
    %7 = vector.broadcast %1 : f32 to vector<1x32xf32>
    %8 = arith.mulf %7, %6 : vector<1x32xf32>
    %9 = arith.addf %5, %8 : vector<1x32xf32>
    %10 = vector.extract_strided_slice %2 {offsets = [2, 0], sizes = [1, 32], strides = [1, 1]} : vector<6x256xf32> to vector<1x32xf32>
    %11 = arith.addf %9, %10 : vector<1x32xf32>
    %cst = arith.constant 0.000000e+00 : f32
    %12 = vector.broadcast %cst : f32 to vector<1x32xf32>
    %13 = arith.maximumf %11, %12 : vector<1x32xf32>
    %c0_2 = arith.constant 0 : index
    %c0_3 = arith.constant 0 : index
    %c0_4 = arith.constant 0 : index
    %14 = vector.load %arg2[%c0_2, %c0_3, %c0_4] : memref<2x32x32xf32, #tpu.memory_space<vmem>>, vector<1x32x32xf32>
    %15 = vector.shape_cast %14 : vector<1x32x32xf32> to vector<32x32xf32>
    %cst_5 = arith.constant dense<0.000000e+00> : vector<1x32xf32>
    %16 = tpu.matmul %13, %15, %cst_5 {dimension_numbers = #tpu.dot_dimension_numbers<[1], [0], [0], [1], [0, 0, 1, 1], [], []>} : vector<1x32xf32>, vector<32x32xf32>, vector<1x32xf32> -> vector<1x32xf32>
    %17 = vector.extract_strided_slice %2 {offsets = [3, 0], sizes = [1, 32], strides = [1, 1]} : vector<6x256xf32> to vector<1x32xf32>
    %18 = arith.addf %16, %17 : vector<1x32xf32>
    %cst_6 = arith.constant 0.000000e+00 : f32
    %19 = vector.broadcast %cst_6 : f32 to vector<1x32xf32>
    %20 = arith.maximumf %18, %19 : vector<1x32xf32>
    %c1_7 = arith.constant 1 : index
    %c0_8 = arith.constant 0 : index
    %c0_9 = arith.constant 0 : index
    %21 = vector.load %arg2[%c1_7, %c0_8, %c0_9] : memref<2x32x32xf32, #tpu.memory_space<vmem>>, vector<1x32x32xf32>
    %22 = vector.shape_cast %21 : vector<1x32x32xf32> to vector<32x32xf32>
    %cst_10 = arith.constant dense<0.000000e+00> : vector<1x32xf32>
    %23 = tpu.matmul %20, %22, %cst_10 {dimension_numbers = #tpu.dot_dimension_numbers<[1], [0], [0], [1], [0, 0, 1, 1], [], []>} : vector<1x32xf32>, vector<32x32xf32>, vector<1x32xf32> -> vector<1x32xf32>
    %24 = vector.extract_strided_slice %2 {offsets = [4, 0], sizes = [1, 32], strides = [1, 1]} : vector<6x256xf32> to vector<1x32xf32>
    %25 = arith.addf %23, %24 : vector<1x32xf32>
    %c0_11 = arith.constant 0 : index
    %c0_12 = arith.constant 0 : index
    %26 = vector.load %arg3[%c0_11, %c0_12] : memref<32x256xf32, #tpu.memory_space<vmem>>, vector<32x256xf32>
    %cst_13 = arith.constant dense<0.000000e+00> : vector<1x256xf32>
    %27 = tpu.matmul %25, %26, %cst_13 {dimension_numbers = #tpu.dot_dimension_numbers<[1], [0], [0], [1], [0, 0, 1, 1], [], []>} : vector<1x32xf32>, vector<32x256xf32>, vector<1x256xf32> -> vector<1x256xf32>
    %28 = vector.extract_strided_slice %2 {offsets = [5, 0], sizes = [1, 256], strides = [1, 1]} : vector<6x256xf32> to vector<1x256xf32>
    %29 = arith.addf %27, %28 : vector<1x256xf32>
    %c0_14 = arith.constant 0 : index
    %c0_15 = arith.constant 0 : index
    %30 = vector.load %arg4[%c0_14, %c0_15] : memref<1x256xf32, #tpu.memory_space<vmem>>, vector<1x256xf32>
    tpu.vector_store %arg4[%c0_14, %c0_15], %29 {strides = array<i32>} : memref<1x256xf32, #tpu.memory_space<vmem>>, vector<1x256xf32>,
    return
  }
}

</mosaic_0001>

<llo_original>
// kernel: hypernet_forward.1
$region0: #{hypernet_forward.1}
  #allocation0 [shape = 'u32[]', space=smem, size = 0x4, offset = 0x4, fixed_abs, tag = 'smem constant byte address 0x4 - core index']
  #allocation1 [shape = 'u32[72,128]{1,0:T(1,128)}', space=vmem, size = 0x9000, scoped, tag = 'internal scratch']
  %s0 = inlined_call_operand.hbm [shape: f32[2], index: 0, kind: input, shape index: {}]
  %s1 = inlined_call_operand.hbm [shape: f32[6,256], index: 1, kind: input, shape index: {}]
  %s2 = inlined_call_operand.hbm [shape: f32[2,32,32], index: 2, kind: input, shape index: {}]
  %s3 = inlined_call_operand.hbm [shape: f32[32,256], index: 3, kind: input, shape index: {}]
  %s4 = inlined_call_operand.vmem [shape: f32[1,256], index: 4, kind: output, shape index: {}]
  %s5 = sld [smem:[#allocation0]]
  $region42: #{hypernet_forward.1} parent=0
    _
  %s7 = ssub.s32 1, %s5
  %s8 = scalar_select 0, %s7, %s5
  $region1: #{hypernet_forward.1} parent=0
    #allocation2 [shape = 'u8[512]{0}', space=smem, size = 0x200, scoped, tag = 'input window, operand 0, single buffered']
    #allocation3 [shape = 's32[1]{0}', space=sflag, size = 0x4, scoped, tag = 'scoped memory for hypernet_forward.1']
    #allocation4 [shape = 's32[1]{0}', space=sflag, size = 0x4, scoped, tag = 'scoped memory for hypernet_forward.1']
    #allocation5 [shape = 'u8[8192]{0}', space=vmem, size = 0x2000, scoped, tag = 'input window, operand 1, single buffered']
    #allocation6 [shape = 'u8[32768]{0}', space=vmem, size = 0x8000, scoped, tag = 'input window, operand 2, single buffered']
    #allocation7 [shape = 's32[1]{0}', space=sflag, size = 0x4, scoped, tag = 'scoped memory for hypernet_forward.1']
    #allocation8 [shape = 'u8[32768]{0}', space=vmem, size = 0x8000, scoped, tag = 'input window, operand 3, single buffered']
    %9 = vsyncpa [#allocation4], 0
    %10 = vsyncpa [#allocation3], 0
    %11 = vsyncpa [#allocation7], 0
    // Predicated region
    $region2: #{hypernet_forward.1} parent=1 // pred_check
      _
    $region3: #{hypernet_forward.1} parent=1 // pred_check_branch
      %13 = sbr.rel (0) target = $region5
    $region4: #{hypernet_forward.1} parent=1 // pred_region
      %15 = vsyncadd [#allocation4], 0
      %s17 = sshll.u32 %s0, 4
      %s18 = int_to_ptr.hbm [resolvable:$true] %s17
      %20 = dma.hbm_to_smem %s18, 16, [#allocation2], [#allocation4]
    $region5: #{hypernet_forward.1} parent=1 // pred_fallthru
      _
    // Predicated region
    $region6: #{hypernet_forward.1} parent=1 // pred_check
      _
    $region7: #{hypernet_forward.1} parent=1 // pred_check_branch
      %22 = sbr.rel (0) target = $region9
    $region8: #{hypernet_forward.1} parent=1 // pred_region
      %24 = vsyncadd [#allocation3], 0
      %s26 = sshll.u32 %s1, 4
      %s27 = int_to_ptr.hbm [resolvable:$true] %s26
      %s28 = sshll.u32 [#allocation5], 4
      %s29 = int_to_ptr.vmem [resolvable:$true] %s28
      %31 = dma.hbm_to_vmem [thread:$0]  %s27, 256, %s29, [#allocation3]
    $region9: #{hypernet_forward.1} parent=1 // pred_fallthru
      _
    // Predicated region
    $region10: #{hypernet_forward.1} parent=1 // pred_check
      _
    $region11: #{hypernet_forward.1} parent=1 // pred_check_branch
      %33 = sbr.rel (0) target = $region13
    $region12: #{hypernet_forward.1} parent=1 // pred_region
      %35 = vsyncadd [#allocation7], 0
      %s36 = sshll.u32 %s2, 4
      %s37 = int_to_ptr.hbm [resolvable:$true] %s36
      %s38 = sshll.u32 [#allocation6], 4
      %s39 = int_to_ptr.vmem [resolvable:$true] %s38
      %44 = dma.hbm_to_vmem [thread:$0]  %s37, 1024, %s39, [#allocation7], 128, 128, 8
    $region13: #{hypernet_forward.1} parent=1 // pred_fallthru
      _
    // Predicated region
    $region14: #{hypernet_forward.1} parent=1 // pred_check
      _
    $region15: #{hypernet_forward.1} parent=1 // pred_check_branch
      %46 = sbr.rel (0) target = $region17
    $region16: #{hypernet_forward.1} parent=1 // pred_region
      %48 = vsyncadd [#allocation7], 0
      %s49 = sshll.u32 %s3, 4
      %s50 = int_to_ptr.hbm [resolvable:$true] %s49
      %s51 = sshll.u32 [#allocation8], 4
      %s52 = int_to_ptr.vmem [resolvable:$true] %s51
      %57 = dma.hbm_to_vmem [thread:$0]  %s50, 1024, %s52, [#allocation7], 256, 256, 16
    $region17: #{hypernet_forward.1} parent=1 // pred_fallthru
      _
    // Predicated region
    $region18: #{hypernet_forward.1} parent=1 // pred_check
      _
    $region19: #{hypernet_forward.1} parent=1 // pred_check_branch
      %59 = sbr.rel (0) target = $region21
    $region20: #{hypernet_forward.1} parent=1 // pred_region
      %61 = dma.done [#allocation4], 16
    $region21: #{hypernet_forward.1} parent=1 // pred_fallthru
      _
    // Predicated region
    $region22: #{hypernet_forward.1} parent=1 // pred_check
      _
    $region23: #{hypernet_forward.1} parent=1 // pred_check_branch
      %63 = sbr.rel (0) target = $region25
    $region24: #{hypernet_forward.1} parent=1 // pred_region
      %65 = dma.done [#allocation3], 256
    $region25: #{hypernet_forward.1} parent=1 // pred_fallthru
      _
    // Predicated region
    $region26: #{hypernet_forward.1} parent=1 // pred_check
      _
    $region27: #{hypernet_forward.1} parent=1 // pred_check_branch
      %67 = sbr.rel (0) target = $region29
    $region28: #{hypernet_forward.1} parent=1 // pred_region
      %69 = dma.done [#allocation7], 1024
    $region29: #{hypernet_forward.1} parent=1 // pred_fallthru
      _
    // Predicated region
    $region30: #{hypernet_forward.1} parent=1 // pred_check
      _
    $region31: #{hypernet_forward.1} parent=1 // pred_check_branch
      %71 = sbr.rel (0) target = $region33
    $region32: #{hypernet_forward.1} parent=1 // pred_region
      %73 = dma.done [#allocation7], 1024
    $region33: #{hypernet_forward.1} parent=1 // pred_fallthru
      _
    %74 = sfence
    %s75 = sld [smem:[#allocation2]]
    %s76 = sld [smem:[#allocation2 + $0x1]]
    %v77 = vld [vmem:[#allocation5] sm:$0x3f]
    %v78 = vld [vmem:[#allocation5 + $0x8] sm:$0x3f]
    %v79 = vstv %s75
    %v80 = vmul.f32 %v79, %v77
    %v81 = vstv %s76
    %v82 = vmul.f32 %v81, %v77
    %v84 = vrot.slane %v82, 1
    %v86 = vadd.f32 %v80, %v84
    %v88 = vrot.slane %v77, 2
    %v90 = vadd.f32 %v86, %v88
    %v91 = vmax.f32 %v90, 0.0
    %v92 = vld [vmem:[#allocation6] sm:$0xff]
    %v93 = vld [vmem:[#allocation6 + $0x8] sm:$0xff]
    %v94 = vld [vmem:[#allocation6 + $0x10] sm:$0xff]
    %v95 = vld [vmem:[#allocation6 + $0x18] sm:$0xff]
    %v96 = vrot.slane %v77, 3
    %vm98 = vcmask 261120
    %v100 = vsel %vm98, %v91, 0
    %102 = vmatpush.msra.mxu0 0.0
    %103 = vmatpush.msra.mxu0 0.0
    %104 = vmatpush.msra.mxu0 0.0
    %105 = vmatpush.msra.mxu0 0.0
    %106 = vmatpush.msra.mxu0 0.0
    %107 = vmatpush.msra.mxu0 0.0
    %108 = vmatpush.msra.mxu0 0.0
    %109 = vmatpush.msra.mxu0 0.0
    %110 = vmatpush.msra.mxu0 0.0
    %111 = vmatpush.msra.mxu0 0.0
    %112 = vmatpush.msra.mxu0 0.0
    %113 = vmatpush.msra.mxu0 0.0
    %114 = vmatpush.msra.mxu0 %v95
    %115 = vmatpush.msra.mxu0 %v94
    %116 = vmatpush.msra.mxu0 %v93
    %117 = vmatpush.msra.mxu0 %v92
    %118 = vmatmul.f32.gmra.mxu0 %v100
    %v119 = vpop.f32.mrf.mxu0
    %v120 = vadd.f32 %v96, %v119
    %121 = vdwg.mxu0
    %v122 = vmax.f32 %v120, 0.0
    %s123 = scalar_lea.vmem [#allocation6], 32
    %v124 = vld [vmem:[%s123] sm:$0xff]
    %v125 = vld [vmem:[%s123 + $0x8] sm:$0xff]
    %v126 = vld [vmem:[%s123 + $0x10] sm:$0xff]
    %v127 = vld [vmem:[%s123 + $0x18] sm:$0xff]
    %v128 = vrot.slane %v77, 4
    %v131 = vsel %vm98, %v122, 0
    %133 = vmatpush.msra.mxu0 0.0
    %134 = vmatpush.msra.mxu0 0.0
    %135 = vmatpush.msra.mxu0 0.0
    %136 = vmatpush.msra.mxu0 0.0
    %137 = vmatpush.msra.mxu0 0.0
    %138 = vmatpush.msra.mxu0 0.0
    %139 = vmatpush.msra.mxu0 0.0
    %140 = vmatpush.msra.mxu0 0.0
    %141 = vmatpush.msra.mxu0 0.0
    %142 = vmatpush.msra.mxu0 0.0
    %143 = vmatpush.msra.mxu0 0.0
    %144 = vmatpush.msra.mxu0 0.0
    %145 = vmatpush.msra.mxu0 %v127
    %146 = vmatpush.msra.mxu0 %v126
    %147 = vmatpush.msra.mxu0 %v125
    %148 = vmatpush.msra.mxu0 %v124
    %149 = vmatmul.f32.gmra.mxu0 %v131
    %v150 = vpop.f32.mrf.mxu0
    %v151 = vadd.f32 %v128, %v150
    %152 = vdwg.mxu0
    %v153 = vld [vmem:[#allocation8] sm:$0xff]
    %v154 = vld [vmem:[#allocation8 + $0x8] sm:$0xff]
    %v155 = vld [vmem:[#allocation8 + $0x10] sm:$0xff]
    %v156 = vld [vmem:[#allocation8 + $0x18] sm:$0xff]
    %v157 = vld [vmem:[#allocation8 + $0x20] sm:$0xff]
    %v158 = vld [vmem:[#allocation8 + $0x28] sm:$0xff]
    %v159 = vld [vmem:[#allocation8 + $0x30] sm:$0xff]
    %v160 = vld [vmem:[#allocation8 + $0x38] sm:$0xff]
    %v162 = vrot.slane %v77, 5
    %v163 = vrot.slane %v78, 5
    %v167 = vsel %vm98, %v151, 0
    %169 = vmatpush.msra.mxu0 0.0
    %170 = vmatpush.msra.mxu0 0.0
    %171 = vmatpush.msra.mxu0 0.0
    %172 = vmatpush.msra.mxu0 0.0
    %173 = vmatpush.msra.mxu0 0.0
    %174 = vmatpush.msra.mxu0 0.0
    %175 = vmatpush.msra.mxu0 0.0
    %176 = vmatpush.msra.mxu0 0.0
    %177 = vmatpush.msra.mxu0 0.0
    %178 = vmatpush.msra.mxu0 0.0
    %179 = vmatpush.msra.mxu0 0.0
    %180 = vmatpush.msra.mxu0 0.0
    %181 = vmatpush.msra.mxu0 %v159
    %182 = vmatpush.msra.mxu0 %v157
    %183 = vmatpush.msra.mxu0 %v155
    %184 = vmatpush.msra.mxu0 %v153
    %185 = vmatmul.f32.gmra.mxu0 %v167
    %v186 = vpop.f32.mrf.mxu0
    %v187 = vadd.f32 %v162, %v186
    %188 = vdwg.mxu0
    %189 = vmatpush.msra.mxu0 0.0
    %190 = vmatpush.msra.mxu0 0.0
    %191 = vmatpush.msra.mxu0 0.0
    %192 = vmatpush.msra.mxu0 0.0
    %193 = vmatpush.msra.mxu0 0.0
    %194 = vmatpush.msra.mxu0 0.0
    %195 = vmatpush.msra.mxu0 0.0
    %196 = vmatpush.msra.mxu0 0.0
    %197 = vmatpush.msra.mxu0 0.0
    %198 = vmatpush.msra.mxu0 0.0
    %199 = vmatpush.msra.mxu0 0.0
    %200 = vmatpush.msra.mxu0 0.0
    %201 = vmatpush.msra.mxu0 %v160
    %202 = vmatpush.msra.mxu0 %v158
    %203 = vmatpush.msra.mxu0 %v156
    %204 = vmatpush.msra.mxu0 %v154
    %205 = vmatmul.f32.gmra.mxu0 %v167
    %v206 = vpop.f32.mrf.mxu0
    %v207 = vadd.f32 %v163, %v206
    %208 = vdwg.mxu0
    %v211 = vrot.slane %v207, 7
    %vm212 = vcmask 1040384
    %v213 = vsel %vm212, %v187, %v211
    %v215 = vlaneseq
    %vm216 = vcmp.ge.s32.totalorder %v215, 0
    %vm217 = vcmp.lt.s32.totalorder %v215, 256
    %vm218 = vmand %vm216, %vm217
    %219 = vst.msk [vmem:[%s4] sm:$0x3] %vm218, %v213
    // Predicated region
    $region34: #{hypernet_forward.1} parent=1 // pred_check
      _
    $region35: #{hypernet_forward.1} parent=1 // pred_check_branch
      %221 = sbr.rel (0) target = $region37
    $region36: #{hypernet_forward.1} parent=1 // pred_region
      _
    $region37: #{hypernet_forward.1} parent=1 // pred_fallthru
      _
    // Predicated region
    $region38: #{hypernet_forward.1} parent=1 // pred_check
      _
    $region39: #{hypernet_forward.1} parent=1 // pred_check_branch
      %223 = sbr.rel (0) target = $region41
    $region40: #{hypernet_forward.1} parent=1 // pred_region
      _
    $region41: #{hypernet_forward.1} parent=1 // pred_fallthru
      _
    %224 = vsyncpa [#allocation3], 1
    %225 = vsyncpa [#allocation7], 1
    %226 = vsyncpa [#allocation4], 1

</llo_original>
